<compile_context>
chip_gen: v6e
topology: v6e:2x2x1
jax: 0.10.0
libtpu: 0.0.40
codegen_flags: <defaults>
</compile_context>

<pallas_src>
import functools

import jax
import jax.numpy as jnp
from jax.experimental import pallas as pl
from jax.experimental.pallas import tpu as pltpu

_PREC = jax.lax.Precision.HIGHEST


def _round_up(a, b):
    return (a + b - 1) // b * b


def _vmem_capacity_bytes(default=64 << 20):
    """Physical VMEM per TensorCore; conservative (v7x-sized) fallback."""
    try:
        info = pltpu.get_tpu_info()
        cap = getattr(info, "vmem_capacity_bytes", None)
        if cap:
            return int(cap)
    except Exception:
        pass
    return default


def _choose_tiles(n, c, cout, hw_pad, budget_bytes, *, min_steps=4, max_bb=8):
    """Pick (batch_block, hw_tile) against the *real* per-step VMEM footprint.

    Per (batch element, lane) the resident bytes are (f32, sublane-padded):
      x block      : c_pad * 4 bytes  x 2 (double-buffered)
      xp_buf       : c_pad * 4 bytes  x 1 (scratch, single-buffered)
      out block    : cout_pad * 4     x 2 (double-buffered)
    """
    c_pad = _round_up(c, 8)
    cout_pad = _round_up(cout, 8)
    bytes_per_lane = 4 * (3 * c_pad + 2 * cout_pad)

    # hw_tile candidates: multiples of 128 that divide hw_pad.
    m = hw_pad // 128
    cands = sorted(128 * d for d in range(1, m + 1) if m % d == 0)

    fitting = [t for t in cands if t * bytes_per_lane <= budget_bytes] or [cands[0]]
    # Largest fitting tile that still leaves >= min_steps grid steps at bb=1;
    # shrinking further is free on a mem-bound kernel.
    hw_tile = fitting[0]
    for t in reversed(fitting):
        hw_tile = t
        if n * (hw_pad // t) >= min_steps:
            break

    # Grow bb (divisor of n, capped so the unrolled gather loop stays small)
    # while the footprint fits and the grid keeps enough steps to pipeline /
    # shard across TensorCores.
    bb = 1
    for b in range(1, min(n, max_bb) + 1):
        if n % b:
            continue
        fits = b * hw_tile * bytes_per_lane <= budget_bytes
        steps = (n // b) * (hw_pad // hw_tile)
        if fits and steps >= min_steps:
            bb = b

    footprint = bb * hw_tile * bytes_per_lane
    return bb, hw_tile, footprint


def _mixup_pointwise_kernel(perm_ref, x_ref, x_hbm_ref, wl_ref, wp_ref, b_ref,
                            o_ref, xp_buf, copy_sems, *, batch_block, hw_tile):
    """One grid step == `batch_block` batch elements x `hw_tile` pixels.

    perm_ref  : SMEM int32[N]              scalar-prefetched mixup permutation
    x_ref     : VMEM f32[bb, C, hw_tile]   this block (auto-pipelined)
    x_hbm_ref : ANY  f32[N, C, HW_pad]     full input in HBM (partner gather)
    wl_ref    : VMEM f32[Cout, C]          lam * W
    wp_ref    : VMEM f32[Cout, C]          (1 - lam) * W
    b_ref     : VMEM f32[Cout, 1]          bias
    o_ref     : VMEM f32[bb, Cout, hw_tile]
    xp_buf    : VMEM f32[bb, C, hw_tile]   scratch for permuted partners
    copy_sems : DMA semaphores [bb]
    """
    i = pl.program_id(0)
    h = pl.program_id(1)
    base = i * batch_block
    col0 = pl.multiple_of(h * hw_tile, 128)

    # Kick off all data-dependent partner gathers up front (bounded: bb <= 8).
    copies = []
    for j in range(batch_block):
        p = perm_ref[base + j]
        cp = pltpu.make_async_copy(
            x_hbm_ref.at[p, :, pl.ds(col0, hw_tile)],
            xp_buf.at[j],
            copy_sems.at[j],
        )
        cp.start()
        copies.append(cp)

    # Hoisted once per grid step (not re-broadcast per element).
    wl = wl_ref[...]
    wp = wp_ref[...]
    b_full = jnp.broadcast_to(b_ref[...], (o_ref.shape[1], o_ref.shape[2]))

    for j in range(batch_block):
        copies[j].wait()
        # lam folded into the weights: (lam*W)@x + ((1-lam)*W)@x[perm]
        out = jnp.dot(wl, x_ref[j], preferred_element_type=jnp.float32,
                      precision=_PREC)
        out = out + jnp.dot(wp, xp_buf[j], preferred_element_type=jnp.float32,
                            precision=_PREC)
        o_ref[j] = (out + b_full).astype(o_ref.dtype)


def _pointwise_kernel(x_ref, w_ref, b_ref, o_ref, *, batch_block):
    """Eval / non-mixing path: just the 1x1 conv, no blend, no partner gather."""
    w = w_ref[...]
    b_full = jnp.broadcast_to(b_ref[...], (o_ref.shape[1], o_ref.shape[2]))
    for j in range(batch_block):
        out = jnp.dot(w, x_ref[j], preferred_element_type=jnp.float32,
                      precision=_PREC)
        o_ref[j] = (out + b_full).astype(o_ref.dtype)


def manifold_mixup_forward(x_nchw, weight, bias, perm, lam,
                           *, training=True, is_mixing=True):
    """Forward pass of ManifoldMixupModule with a 1x1-conv base module.

    x_nchw : (N, C, H, W) float32
    weight : (Cout, C)    float32   (1x1 conv weight, squeezed)
    bias   : (Cout,)      float32
    perm   : (N,)         int32     mixup batch permutation
    lam    : scalar       float32   mixup lambda
    """
    N, C, H, W = x_nchw.shape
    Cout = weight.shape[0]
    HW = H * W
    hw_pad = _round_up(HW, 128)  # lane-dense stores (unmasked vst)

    # NCHW -> (N, C, H*W) is a pure reshape (no transpose): pixels on lanes.
    x = x_nchw.reshape(N, C, HW).astype(jnp.float32)
    if hw_pad != HW:
        x = jnp.pad(x, ((0, 0), (0, 0), (0, hw_pad - HW)))

    w = weight.astype(jnp.float32)                   # (Cout, C)
    b2d = bias.reshape(Cout, 1).astype(jnp.float32)  # lane-broadcast bias

    # Per-generation VMEM budgeting (v7x: 64 MiB/TC, v5e/v6e: 128 MiB).
    cap = _vmem_capacity_bytes()
    budget = min(cap // 2, 32 << 20)
    bb, hw_tile, footprint = _choose_tiles(N, C, Cout, hw_pad, budget)
    vmem_limit = int(min(cap, max(2 * footprint + (4 << 20), 16 << 20)))

    grid = (N // bb, hw_pad // hw_tile)
    compiler_params = pltpu.CompilerParams(
        # every step reads x[i], gathers x[perm[i]] and writes a disjoint
        # out block -> no cross-step dependency; lets v7x shard over 2 TCs.
        dimension_semantics=("parallel", "parallel"),
        vmem_limit_bytes=vmem_limit,
    )

    if training and is_mixing:
        lam_f = jnp.asarray(lam, jnp.float32)
        w_lam = (lam_f * w).astype(jnp.float32)
        w_1ml = ((1.0 - lam_f) * w).astype(jnp.float32)
        perm = perm.astype(jnp.int32)

        kernel = functools.partial(_mixup_pointwise_kernel,
                                   batch_block=bb, hw_tile=hw_tile)
        grid_spec = pltpu.PrefetchScalarGridSpec(
            num_scalar_prefetch=1,          # perm lands in SMEM
            grid=grid,
            in_specs=[
                # this block of batch elements / pixel tile (auto-pipelined)
                pl.BlockSpec((bb, C, hw_tile), lambda i, h, perm_ref: (i, 0, h)),
                # full input left in HBM; permuted partners gathered manually
                pl.BlockSpec(memory_space=pl.ANY),
                # lam*W, (1-lam)*W, bias (same block every step)
                pl.BlockSpec((Cout, C), lambda i, h, perm_ref: (0, 0)),
                pl.BlockSpec((Cout, C), lambda i, h, perm_ref: (0, 0)),
                pl.BlockSpec((Cout, 1), lambda i, h, perm_ref: (0, 0)),
            ],
            out_specs=pl.BlockSpec((bb, Cout, hw_tile),
                                   lambda i, h, perm_ref: (i, 0, h)),
            scratch_shapes=[
                pltpu.VMEM((bb, C, hw_tile), jnp.float32),
                pltpu.SemaphoreType.DMA((bb,)),
            ],
        )
        out = pl.pallas_call(
            kernel,
            out_shape=jax.ShapeDtypeStruct((N, Cout, hw_pad), jnp.float32),
            grid_spec=grid_spec,
            compiler_params=compiler_params,
        )(perm, x, x, w_lam, w_1ml, b2d)
    else:
        # No mixing: PyTorch skips transform_input entirely -> no partner DMA,
        # no blend, no 0*Inf -> NaN hazard, ~33% less HBM traffic.
        kernel = functools.partial(_pointwise_kernel, batch_block=bb)
        grid_spec = pltpu.PrefetchScalarGridSpec(
            num_scalar_prefetch=0,
            grid=grid,
            in_specs=[
                pl.BlockSpec((bb, C, hw_tile), lambda i, h: (i, 0, h)),
                pl.BlockSpec((Cout, C), lambda i, h: (0, 0)),
                pl.BlockSpec((Cout, 1), lambda i, h: (0, 0)),
            ],
            out_specs=pl.BlockSpec((bb, Cout, hw_tile), lambda i, h: (i, 0, h)),
        )
        out = pl.pallas_call(
            kernel,
            out_shape=jax.ShapeDtypeStruct((N, Cout, hw_pad), jnp.float32),
            grid_spec=grid_spec,
            compiler_params=compiler_params,
        )(x, w, b2d)

    # (N, Cout, HW_pad) -> slice off lane padding -> NCHW (pure reshape).
    return out[:, :, :HW].reshape(N, Cout, H, W)


if __name__ == "__main__":
    key = jax.random.PRNGKey(0)
    k_x, k_w, k_b, k_perm, k_lam = jax.random.split(key, 5)

    N, C, H, W = 2, 4, 16, 16
    Cout = 8

    x = jax.random.normal(k_x, (N, C, H, W), dtype=jnp.float32)
    # Deterministic synthetic base-module params (1x1 Conv2d: C -> Cout).
    weight = jax.random.normal(k_w, (Cout, C), dtype=jnp.float32) * 0.1
    bias = jax.random.normal(k_b, (Cout,), dtype=jnp.float32) * 0.1

    # Mixup state (normally supplied by the callback): Beta(alpha, alpha) lambda
    # and a random batch permutation.
    alpha = 0.4
    lam = jax.random.beta(k_lam, alpha, alpha)
    perm = jax.random.permutation(k_perm, N).astype(jnp.int32)

    out = manifold_mixup_forward(x, weight, bias, perm, lam,
                                 training=True, is_mixing=True)
    out = jax.block_until_ready(out)

    # Pure-JAX reference check (mixup blend + 1x1 conv), fp32-accurate.
    x_mixed = lam * x + (1.0 - lam) * x[perm]
    ref = (jnp.einsum("nchw,oc->nohw", x_mixed, weight, precision="highest")
           + bias[None, :, None, None])
    assert out.shape == (N, Cout, H, W)
    assert jnp.allclose(out, ref, atol=1e-5, rtol=1e-5)

    # Also exercise the non-mixing (eval / is_mixing=False) path.
    out_eval = jax.block_until_ready(
        manifold_mixup_forward(x, weight, bias, perm, lam,
                               training=False, is_mixing=False))
    ref_eval = (jnp.einsum("nchw,oc->nohw", x, weight, precision="highest")
                + bias[None, :, None, None])
    assert jnp.allclose(out_eval, ref_eval, atol=1e-5, rtol=1e-5)

    print("KERNEL_OK")
</pallas_src>

<mosaic_0001>
module attributes {stable_mosaic.version = 11 : i64} {
  func.func @_mixup_pointwise_kernel(%arg0: i32, %arg1: i32, %arg2: memref<2xi32, #tpu.memory_space<smem>>, %arg3: memref<1x4x128xf32, #tpu.memory_space<vmem>>, %arg4: memref<2x4x256xf32, #tpu.memory_space<any>>, %arg5: memref<8x4xf32, #tpu.memory_space<vmem>>, %arg6: memref<8x4xf32, #tpu.memory_space<vmem>>, %arg7: memref<8x1xf32, #tpu.memory_space<vmem>>, %arg8: memref<1x8x128xf32, #tpu.memory_space<vmem>>, %arg9: memref<1x4x128xf32, #tpu.memory_space<vmem>>, %arg10: memref<1x!tpu.dma_semaphore, #tpu.memory_space<semaphore_mem>>) attributes {dimension_semantics = [#tpu.dimension_semantics<parallel>, #tpu.dimension_semantics<parallel>], iteration_bounds = array<i64: 2, 2>, scalar_prefetch = 1 : i64, scratch_operands = 2 : i64, tpu.core_type = #tpu.core_type<tc>, window_params = [{transform_indices = @transform_0, window_bounds = array<i64: 1, 4, 128>}, {}, {pipeline_mode = #tpu.pipeline_mode<synchronous>, transform_indices = @transform_2, window_bounds = array<i64: 8, 4>}, {pipeline_mode = #tpu.pipeline_mode<synchronous>, transform_indices = @transform_3, window_bounds = array<i64: 8, 4>}, {pipeline_mode = #tpu.pipeline_mode<synchronous>, transform_indices = @transform_4, window_bounds = array<i64: 8, 1>}, {transform_indices = @transform_5, window_bounds = array<i64: 1, 8, 128>}]} {
    %c1_i32 = arith.constant 1 : i32
    %0 = arith.muli %arg0, %c1_i32 : i32
    %c128_i32 = arith.constant 128 : i32
    %1 = arith.muli %arg1, %c128_i32 : i32
    %2 = tpu.assume_multiple %1, 128 : i32
    %c0_i32 = arith.constant 0 : i32
    %3 = arith.addi %0, %c0_i32 : i32
    %4 = arith.index_cast %3 : i32 to index
    %5 = memref.load %arg2[%4] : memref<2xi32, #tpu.memory_space<smem>>
    %c0_i32_0 = arith.constant 0 : i32
    %c0_i32_1 = arith.constant 0 : i32
    %c0_i32_2 = arith.constant 0 : i32
    %6 = tpu.memref_slice %arg4[%5, %c0_i32_2, %2] : memref<2x4x256xf32, #tpu.memory_space<any>> -> memref<1x4x128xf32, #tpu.memory_space<any>>
    %7 = tpu.memref_squeeze %6 : memref<1x4x128xf32, #tpu.memory_space<any>> -> memref<4x128xf32, #tpu.memory_space<any>>
    %c0_i32_3 = arith.constant 0 : i32
    %c0_i32_4 = arith.constant 0 : i32
    %8 = tpu.memref_slice %arg9[%c0_i32_0, %c0_i32_3, %c0_i32_4] : memref<1x4x128xf32, #tpu.memory_space<vmem>> -> memref<1x4x128xf32, #tpu.memory_space<vmem>>
    %9 = tpu.memref_squeeze %8 : memref<1x4x128xf32, #tpu.memory_space<vmem>> -> memref<4x128xf32, #tpu.memory_space<vmem>>
    %10 = tpu.memref_slice %arg10[%c0_i32_1] : memref<1x!tpu.dma_semaphore, #tpu.memory_space<semaphore_mem>> -> memref<1x!tpu.dma_semaphore, #tpu.memory_space<semaphore_mem>>
    %11 = tpu.memref_squeeze %10 : memref<1x!tpu.dma_semaphore, #tpu.memory_space<semaphore_mem>> -> memref<!tpu.dma_semaphore, #tpu.memory_space<semaphore_mem>>
    tpu.enqueue_dma source(%7 : memref<4x128xf32, #tpu.memory_space<any>>) target(%9 : memref<4x128xf32, #tpu.memory_space<vmem>>) target_semaphore(%11 : memref<!tpu.dma_semaphore, #tpu.memory_space<semaphore_mem>>)
    %c0 = arith.constant 0 : index
    %c0_5 = arith.constant 0 : index
    %12 = vector.load %arg5[%c0, %c0_5] : memref<8x4xf32, #tpu.memory_space<vmem>>, vector<8x4xf32>
    %c0_6 = arith.constant 0 : index
    %c0_7 = arith.constant 0 : index
    %13 = vector.load %arg6[%c0_6, %c0_7] : memref<8x4xf32, #tpu.memory_space<vmem>>, vector<8x4xf32>
    %c0_8 = arith.constant 0 : index
    %c0_9 = arith.constant 0 : index
    %14 = vector.load %arg7[%c0_8, %c0_9] : memref<8x1xf32, #tpu.memory_space<vmem>>, vector<8x1xf32>
    %15 = vector.shape_cast %14 : vector<8x1xf32> to vector<8x1xf32>
    %16 = vector.broadcast %15 : vector<8x1xf32> to vector<8x128xf32>
    %c0_i32_10 = arith.constant 0 : i32
    %c0_i32_11 = arith.constant 0 : i32
    %c0_i32_12 = arith.constant 0 : i32
    %17 = tpu.memref_slice %arg4[%5, %c0_i32_12, %2] : memref<2x4x256xf32, #tpu.memory_space<any>> -> memref<1x4x128xf32, #tpu.memory_space<any>>
    %18 = tpu.memref_squeeze %17 : memref<1x4x128xf32, #tpu.memory_space<any>> -> memref<4x128xf32, #tpu.memory_space<any>>
    %c0_i32_13 = arith.constant 0 : i32
    %c0_i32_14 = arith.constant 0 : i32
    %19 = tpu.memref_slice %arg9[%c0_i32_10, %c0_i32_13, %c0_i32_14] : memref<1x4x128xf32, #tpu.memory_space<vmem>> -> memref<1x4x128xf32, #tpu.memory_space<vmem>>
    %20 = tpu.memref_squeeze %19 : memref<1x4x128xf32, #tpu.memory_space<vmem>> -> memref<4x128xf32, #tpu.memory_space<vmem>>
    %21 = tpu.memref_slice %arg10[%c0_i32_11] : memref<1x!tpu.dma_semaphore, #tpu.memory_space<semaphore_mem>> -> memref<1x!tpu.dma_semaphore, #tpu.memory_space<semaphore_mem>>
    %22 = tpu.memref_squeeze %21 : memref<1x!tpu.dma_semaphore, #tpu.memory_space<semaphore_mem>> -> memref<!tpu.dma_semaphore, #tpu.memory_space<semaphore_mem>>
    tpu.wait_dma2 semaphore(%22 : memref<!tpu.dma_semaphore, #tpu.memory_space<semaphore_mem>>) src(%18 : memref<4x128xf32, #tpu.memory_space<any>>) dst(%20 : memref<4x128xf32, #tpu.memory_space<vmem>>)
    %c0_15 = arith.constant 0 : index
    %c0_16 = arith.constant 0 : index
    %c0_17 = arith.constant 0 : index
    %23 = vector.load %arg3[%c0_15, %c0_16, %c0_17] : memref<1x4x128xf32, #tpu.memory_space<vmem>>, vector<1x4x128xf32>
    %24 = vector.shape_cast %23 : vector<1x4x128xf32> to vector<4x128xf32>
    %cst = arith.constant dense<0.000000e+00> : vector<8x128xf32>
    %25 = tpu.matmul %12, %24, %cst {dimension_numbers = #tpu.dot_dimension_numbers<[1], [0], [0], [1], [0, 0, 1, 1], [], []>, precision = #tpu.contract_precision<fp32>} : vector<8x4xf32>, vector<4x128xf32>, vector<8x128xf32> -> vector<8x128xf32>
    %c0_18 = arith.constant 0 : index
    %c0_19 = arith.constant 0 : index
    %c0_20 = arith.constant 0 : index
    %26 = vector.load %arg9[%c0_18, %c0_19, %c0_20] : memref<1x4x128xf32, #tpu.memory_space<vmem>>, vector<1x4x128xf32>
    %27 = vector.shape_cast %26 : vector<1x4x128xf32> to vector<4x128xf32>
    %cst_21 = arith.constant dense<0.000000e+00> : vector<8x128xf32>
    %28 = tpu.matmul %13, %27, %cst_21 {dimension_numbers = #tpu.dot_dimension_numbers<[1], [0], [0], [1], [0, 0, 1, 1], [], []>, precision = #tpu.contract_precision<fp32>} : vector<8x4xf32>, vector<4x128xf32>, vector<8x128xf32> -> vector<8x128xf32>
    %29 = arith.addf %25, %28 : vector<8x128xf32>
    %30 = arith.addf %29, %16 : vector<8x128xf32>
    %c0_22 = arith.constant 0 : index
    %c0_23 = arith.constant 0 : index
    %c0_24 = arith.constant 0 : index
    %31 = vector.load %arg8[%c0_22, %c0_23, %c0_24] : memref<1x8x128xf32, #tpu.memory_space<vmem>>, vector<1x8x128xf32>
    %32 = vector.shape_cast %31 : vector<1x8x128xf32> to vector<8x128xf32>
    %33 = vector.shape_cast %30 : vector<8x128xf32> to vector<1x8x128xf32>
    tpu.vector_store %arg8[%c0_22, %c0_23, %c0_24], %33 {strides = array<i32>} : memref<1x8x128xf32, #tpu.memory_space<vmem>>, vector<1x8x128xf32>,
    return
  }
  func.func @transform_0(%arg0: i32, %arg1: i32, %arg2: memref<2xi32, #tpu.memory_space<smem>>) -> (i32, i32, i32) {
    %c0_i32 = arith.constant 0 : i32
    %c0_i32_0 = arith.constant 0 : i32
    return %arg0, %c0_i32, %arg1 : i32, i32, i32
  }
  func.func @transform_2(%arg0: i32, %arg1: i32, %arg2: memref<2xi32, #tpu.memory_space<smem>>) -> (i32, i32) {
    %c0_i32 = arith.constant 0 : i32
    %c0_i32_0 = arith.constant 0 : i32
    %c0_i32_1 = arith.constant 0 : i32
    return %c0_i32, %c0_i32_0 : i32, i32
  }
  func.func @transform_3(%arg0: i32, %arg1: i32, %arg2: memref<2xi32, #tpu.memory_space<smem>>) -> (i32, i32) {
    %c0_i32 = arith.constant 0 : i32
    %c0_i32_0 = arith.constant 0 : i32
    %c0_i32_1 = arith.constant 0 : i32
    return %c0_i32, %c0_i32_0 : i32, i32
  }
  func.func @transform_4(%arg0: i32, %arg1: i32, %arg2: memref<2xi32, #tpu.memory_space<smem>>) -> (i32, i32) {
    %c0_i32 = arith.constant 0 : i32
    %c0_i32_0 = arith.constant 0 : i32
    %c0_i32_1 = arith.constant 0 : i32
    return %c0_i32, %c0_i32_0 : i32, i32
  }
  func.func @transform_5(%arg0: i32, %arg1: i32, %arg2: memref<2xi32, #tpu.memory_space<smem>>) -> (i32, i32, i32) {
    %c0_i32 = arith.constant 0 : i32
    %c0_i32_0 = arith.constant 0 : i32
    return %arg0, %c0_i32, %arg1 : i32, i32, i32
  }
}

</mosaic_0001>

<llo_original>
// kernel: tpu_custom_call.1
$region0: #{tpu_custom_call.1}
  #allocation0 [shape = 'u32[]', space=smem, size = 0x4, offset = 0x4, fixed_abs, tag = 'smem constant byte address 0x4 - core index']
  #allocation1 [shape = 'u32[144,128]{1,0:T(1,128)}', space=vmem, size = 0x12000, scoped, tag = 'internal scratch']
  #allocation2 [shape = 'f32[1,4,128]{2,1,0:T(4,128)}', space=vmem, size = 0x800, scoped, tag = 'scratch operand']
  #allocation3 [shape = 's32[1]{0}', space=sflag, size = 0x4, scoped, tag = 'scratch operand']
  #allocation4 [shape = 's32[1]{0}', space=sflag, size = 0x4, scoped, tag = 'scoped memory for tpu_custom_call.1']
  #allocation5 [shape = 'u8[512]{0}', space=smem, size = 0x200, scoped, tag = 'prefetched SMEM operand 0']
  #allocation8 [shape = 's32[]', space=sflag, size = 0x4, offset = 0, fixed_abs, tag = 'sflag constant byte address 0x0 - dummy sync flag']
  %s0 = inlined_call_operand.vmem [shape: s32[2], index: 0, kind: input, shape index: {}]
  %s1 = inlined_call_operand.vmem [shape: f32[2,4,256], index: 1, kind: input, shape index: {}]
  %s2 = inlined_call_operand.vmem [shape: f32[2,4,256], index: 2, kind: input, shape index: {}]
  %s3 = inlined_call_operand.vmem [shape: f32[8,4], index: 3, kind: input, shape index: {}]
  %s4 = inlined_call_operand.vmem [shape: f32[8,4], index: 4, kind: input, shape index: {}]
  %s5 = inlined_call_operand.vmem [shape: f32[8,1], index: 5, kind: input, shape index: {}]
  %s6 = inlined_call_operand.hbm [shape: f32[2,8,256], index: 6, kind: output, shape index: {}]
  %s7 = sld [smem:[#allocation0]]
  $region79: #{tpu_custom_call.1} parent=0
    _
  %s9 = ssub.s32 1, %s7
  %s10 = scalar_select 0, %s9, %s7
  %s11 = sshll.u32 %s0, 4
  %s12 = int_to_ptr.vmem [resolvable:$true] %s11
  %14 = dma.vmem_to_smem %s12, 16, [#allocation5], [#allocation4]
  %15 = dma.done [#allocation4], 16
  %16 = sfence
  $region1: #{tpu_custom_call.1} parent=0
    #allocation6 [shape = 'u8[8192]{0}', space=vmem, size = 0x2000, scoped, tag = 'output window, operand 0']
    #allocation7 [shape = 's32[2]{0}', space=sflag, size = 0x8, scoped, tag = 'scoped memory for tpu_custom_call.1']
    %17 = vsyncpa [#allocation7], 0
    %s18 = scalar_lea.sflag [#allocation7], 1
    %19 = vsyncpa %s18, 0
    loop: start=0, step=1, limit=6
    $region2: #{tpu_custom_call.1} parent=1 // loop_pre_header
      _
    $region3: #{tpu_custom_call.1} parent=1 // loop_header
      %s21 = sphi 0, %s25
      %p22 = scmp.ge.s32.totalorder %s21, 6
      %s28 = sphi 0, %s40
      %s29 = sphi 0, %s36
      %s30 = sphi 0, %s28
      %s31 = sphi 0, %s29
      %s32 = sphi 0, %s30
      %s33 = sphi 0, %s31
      %s45 = sphi 0, %s47
      %s48 = sphi 0, %s45
      %s49 = sphi 0, %s48
      %s65 = sphi 0, %s49
      %s69 = sphi 0, %s69
      %s71 = sphi 0, %s69
      %s72 = sphi 0, %s71
      %s86 = sphi 0, %s72
      %s90 = sphi 0, %s90
      %s92 = sphi 0, %s90
      %s93 = sphi 0, %s92
      %s107 = sphi 0, %s93
      %s111 = sphi 0, %s111
      %s113 = sphi 0, %s111
      %s114 = sphi 0, %s113
      %s128 = sphi 0, %s114
      %s136 = sphi 0, %s138
      %s139 = sphi 0, %s136
      %s140 = sphi 0, %s139
      %s156 = sphi 0, %s140
    $region4: #{tpu_custom_call.1} parent=1 // loop_header_branch
      %24 = sbr.rel (%p22) target = $region8
    $region5: #{tpu_custom_call.1} parent=1 // loop_body
      %s26 = ssub.s32 %s21, 1
      %s27 = ssub.s32 %s21, 2
      %s34 = sadd.s32 1, %s29
      %p35 = scmp.ge.s32.totalorder %s34, 2
      %s36 = scalar_select %p35, 0, %s34
      %s37 = sadd.s32 1, %s28
      %s38 = scalar_select %p35, %s37, %s28
      %p39 = scmp.ge.s32.totalorder %s38, 2
      %s40 = scalar_select %p39, 0, %s38
      %s41 = ssub.s32 %s28, %s40
      %s42 = ssub.s32 %s29, %s36
      %s43 = sor.u32 %s41, %s42
      %p44 = scmp.eq.s32.totalorder %s43, 0
      %s46 = sadd.s32 %s45, 1
      %s47 = scalar_select %p44, %s45, %s46
      %p50 = pneg %p44
      %p51 = scmp.eq.s32.totalorder %s21, 3
      %p52 = por %p50, %p51
      %p53 = scmp.ne.s32.totalorder %s45, %s48
      %p54 = scmp.eq.s32.totalorder %s21, 0
      %p55 = por %p53, %p54
      %p56 = scmp.ne.s32.totalorder %s45, %s48
      %p57 = scmp.eq.s32.totalorder %s26, 3
      %p58 = por %p56, %p57
      %p59 = scmp.ne.s32.totalorder %s48, %s49
      %p60 = scmp.eq.s32.totalorder %s26, 0
      %p61 = por %p59, %p60
      %p62 = scmp.ne.s32.totalorder %s48, %s49
      %p63 = scmp.eq.s32.totalorder %s27, 3
      %p64 = por %p62, %p63
      %p66 = scmp.ne.s32.totalorder %s49, %s65
      %p67 = scmp.eq.s32.totalorder %s27, 0
      %p68 = por %p66, %p67
      %s70 = sadd.s32 %s69, 1
      %p73 = scmp.eq.s32.totalorder %s21, 3
      %p74 = scmp.ne.s32.totalorder %s69, %s71
      %p75 = scmp.eq.s32.totalorder %s21, 0
      %p76 = por %p74, %p75
      %p77 = scmp.ne.s32.totalorder %s69, %s71
      %p78 = scmp.eq.s32.totalorder %s26, 3
      %p79 = por %p77, %p78
      %p80 = scmp.ne.s32.totalorder %s71, %s72
      %p81 = scmp.eq.s32.totalorder %s26, 0
      %p82 = por %p80, %p81
      %p83 = scmp.ne.s32.totalorder %s71, %s72
      %p84 = scmp.eq.s32.totalorder %s27, 3
      %p85 = por %p83, %p84
      %p87 = scmp.ne.s32.totalorder %s72, %s86
      %p88 = scmp.eq.s32.totalorder %s27, 0
      %p89 = por %p87, %p88
      %s91 = sadd.s32 %s90, 1
      %p94 = scmp.eq.s32.totalorder %s21, 3
      %p95 = scmp.ne.s32.totalorder %s90, %s92
      %p96 = scmp.eq.s32.totalorder %s21, 0
      %p97 = por %p95, %p96
      %p98 = scmp.ne.s32.totalorder %s90, %s92
      %p99 = scmp.eq.s32.totalorder %s26, 3
      %p100 = por %p98, %p99
      %p101 = scmp.ne.s32.totalorder %s92, %s93
      %p102 = scmp.eq.s32.totalorder %s26, 0
      %p103 = por %p101, %p102
      %p104 = scmp.ne.s32.totalorder %s92, %s93
      %p105 = scmp.eq.s32.totalorder %s27, 3
      %p106 = por %p104, %p105
      %p108 = scmp.ne.s32.totalorder %s93, %s107
      %p109 = scmp.eq.s32.totalorder %s27, 0
      %p110 = por %p108, %p109
      %s112 = sadd.s32 %s111, 1
      %p115 = scmp.eq.s32.totalorder %s21, 3
      %p116 = scmp.ne.s32.totalorder %s111, %s113
      %p117 = scmp.eq.s32.totalorder %s21, 0
      %p118 = por %p116, %p117
      %p119 = scmp.ne.s32.totalorder %s111, %s113
      %p120 = scmp.eq.s32.totalorder %s26, 3
      %p121 = por %p119, %p120
      %p122 = scmp.ne.s32.totalorder %s113, %s114
      %p123 = scmp.eq.s32.totalorder %s26, 0
      %p124 = por %p122, %p123
      %p125 = scmp.ne.s32.totalorder %s113, %s114
      %p126 = scmp.eq.s32.totalorder %s27, 3
      %p127 = por %p125, %p126
      %p129 = scmp.ne.s32.totalorder %s114, %s128
      %p130 = scmp.eq.s32.totalorder %s27, 0
      %p131 = por %p129, %p130
      %s132 = ssub.s32 %s28, %s40
      %s133 = ssub.s32 %s29, %s36
      %s134 = sor.u32 %s132, %s133
      %p135 = scmp.eq.s32.totalorder %s134, 0
      %s137 = sadd.s32 %s136, 1
      %s138 = scalar_select %p135, %s136, %s137
      %p141 = pneg %p135
      %p142 = scmp.eq.s32.totalorder %s21, 3
      %p143 = por %p141, %p142
      %p144 = scmp.ne.s32.totalorder %s136, %s139
      %p145 = scmp.eq.s32.totalorder %s21, 0
      %p146 = por %p144, %p145
      %p147 = scmp.ne.s32.totalorder %s136, %s139
      %p148 = scmp.eq.s32.totalorder %s26, 3
      %p149 = por %p147, %p148
      %p150 = scmp.ne.s32.totalorder %s139, %s140
      %p151 = scmp.eq.s32.totalorder %s26, 0
      %p152 = por %p150, %p151
      %p153 = scmp.ne.s32.totalorder %s139, %s140
      %p154 = scmp.eq.s32.totalorder %s27, 3
      %p155 = por %p153, %p154
      %p157 = scmp.ne.s32.totalorder %s140, %s156
      %p158 = scmp.eq.s32.totalorder %s27, 0
      %p159 = por %p157, %p158
      %p160 = scmp.le.s32.totalorder 1, %s21
      %p161 = scmp.lt.s32.totalorder %s21, 5
      %p162 = pnand %p160, %p161
      %p163 = pneg %p162
      // Predicated region
      $region9: #{tpu_custom_call.1} parent=5 // pred_check
        _
      $region10: #{tpu_custom_call.1} parent=5 // pred_check_branch
        %165 = sbr.rel (%p162) target = $region12
      $region11: #{tpu_custom_call.1} parent=5 // pred_region
        %s166 = ssub.s32 %s21, 1
        // Predicated region
        $region13: #{tpu_custom_call.1} parent=11 // pred_check
          %p167 = pneg %p82
        $region14: #{tpu_custom_call.1} parent=11 // pred_check_branch
          %169 = sbr.rel (%p167) target = $region16
        $region15: #{tpu_custom_call.1} parent=11 // pred_region
          _
        $region16: #{tpu_custom_call.1} parent=11 // pred_fallthru
          _
        // Predicated region
        $region17: #{tpu_custom_call.1} parent=11 // pred_check
          %p170 = pneg %p103
        $region18: #{tpu_custom_call.1} parent=11 // pred_check_branch
          %172 = sbr.rel (%p170) target = $region20
        $region19: #{tpu_custom_call.1} parent=11 // pred_region
          _
        $region20: #{tpu_custom_call.1} parent=11 // pred_fallthru
          _
        // Predicated region
        $region21: #{tpu_custom_call.1} parent=11 // pred_check
          %p173 = pneg %p124
        $region22: #{tpu_custom_call.1} parent=11 // pred_check_branch
          %175 = sbr.rel (%p173) target = $region24
        $region23: #{tpu_custom_call.1} parent=11 // pred_region
          _
        $region24: #{tpu_custom_call.1} parent=11 // pred_fallthru
          _
      $region12: #{tpu_custom_call.1} parent=5 // pred_fallthru
        _
      %p176 = scmp.lt.s32.totalorder %s21, 4
      // Predicated region
      $region25: #{tpu_custom_call.1} parent=5 // pred_check
        %p177 = pneg %p176
      $region26: #{tpu_custom_call.1} parent=5 // pred_check_branch
        %179 = sbr.rel (%p177) target = $region28
      $region27: #{tpu_custom_call.1} parent=5 // pred_region
        // Predicated region
        $region29: #{tpu_custom_call.1} parent=27 // pred_check
          %p180 = pneg %p55
        $region30: #{tpu_custom_call.1} parent=27 // pred_check_branch
          %182 = sbr.rel (%p180) target = $region32
        $region31: #{tpu_custom_call.1} parent=27 // pred_region
          %p183 = scmp.lt.s32.totalorder %s28, 1
          %s184 = scalar_select %p183, %s28, 1
          %p185 = scmp.lt.s32.totalorder %s29, 1
          %s186 = scalar_select %p185, %s29, 1
          %s187 = smul.addr %s184, 2
          %s188 = sadd.s32 %s186, %s187
          %s189 = smul.addr %s188, 4
          %s190 = scalar_lea.vmem %s1, %s189
        $region32: #{tpu_custom_call.1} parent=27 // pred_fallthru
          _
      $region28: #{tpu_custom_call.1} parent=5 // pred_fallthru
        _
      %p191 = scmp.le.s32.totalorder 1, %s21
      %p192 = scmp.lt.s32.totalorder %s21, 5
      %p193 = pnand %p191, %p192
      %p194 = pneg %p193
      // Predicated region
      $region33: #{tpu_custom_call.1} parent=5 // pred_check
        _
      $region34: #{tpu_custom_call.1} parent=5 // pred_check_branch
        %196 = sbr.rel (%p193) target = $region36
      $region35: #{tpu_custom_call.1} parent=5 // pred_region
        %s197 = ssub.s32 %s21, 1
        %p198 = scmp.lt.s32.totalorder %s30, 1
        %s199 = scalar_select %p198, %s30, 1
        %p200 = scmp.lt.s32.totalorder %s31, 1
        %s201 = scalar_select %p200, %s31, 1
        %s202 = smul.addr %s199, 2
        %s203 = sadd.s32 %s201, %s202
        %s204 = smul.addr %s203, 4
        %s205 = scalar_lea.vmem %s1, %s204
        %p206 = pneg %p61
        %p207 = pneg %p58
        %p208 = pneg %p82
        %p209 = pneg %p79
        %p210 = pneg %p103
        %p211 = pneg %p100
        %p212 = pneg %p124
        %p213 = pneg %p121
        %p214 = pneg %p152
        %p215 = pneg %p149
        %s216 = sand.u32 %s139, 1
        %s217 = scalar_lea.sflag [#allocation7], %s216
        %s218 = sand.u32 %s139, 1
        %s219 = smul.addr %s218, 8
        %s220 = scalar_lea.vmem [#allocation6], %s219
        %p221 = scmp.lt.s32.totalorder %s30, 1
        %s222 = scalar_select %p221, %s30, 1
        %p223 = scmp.lt.s32.totalorder %s31, 1
        %s224 = scalar_select %p223, %s31, 1
        %s225 = smul.addr %s222, 2
        %s226 = sadd.s32 %s224, %s225
        %s227 = smul.addr %s226, 4
        %s228 = scalar_lea.vmem %s1, %s227
        %s229 = smul.u32 %s31, 128
        %s230 = sld [smem:[#allocation5 + %s30]]
        %s231 = sshra.s32 %s229, 7
        %s232 = sand.u32 %s229, 127
        %s233 = smul.u32 %s230, 2
        %s234 = sadd.s32 %s231, %s233
        %s235 = smul.addr %s234, 4
        %s236 = scalar_lea.vmem %s2, %s235
        %p238 = scmp.lt.u32.totalorder 4, 8
        %p239 = pneg %p238
        // Predicated region
        $region37: #{tpu_custom_call.1} parent=35 // pred_check
          _
        $region38: #{tpu_custom_call.1} parent=35 // pred_check_branch
          %241 = sbr.rel (%p238) target = $region40
        $region39: #{tpu_custom_call.1} parent=35 // pred_region
          %s257 = sand.u32 4, 7
          %p258 = scmp.eq.s32.totalorder %s257, 0
          %p259 = pneg %p258
          // Predicated region
          $region52: #{tpu_custom_call.1} parent=39 // pred_check
            _
          $region53: #{tpu_custom_call.1} parent=39 // pred_check_branch
            %261 = sbr.rel (%p258) target = $region55
          $region54: #{tpu_custom_call.1} parent=39 // pred_region
            %s262 = sand.u32 4, 7
            %s263 = ssub.s32 4, %s262
            %s264 = scalar_lea.vmem %s236, %s263
            %s265 = ssub.s32 4, %s262
            %s266 = scalar_lea.vmem [#allocation2], %s265
            %s267 = sshll.u32 1, %s262
            %s268 = ssub.s32 %s267, 1
            loop: start=0, step=1, limit=1
            $region56: #{tpu_custom_call.1} parent=54 // loop_pre_header
              _
            $region57: #{tpu_custom_call.1} parent=54 // loop_header
              %s270 = sphi 0, %s274
              %p271 = scmp.ge.s32.totalorder %s270, 1
              %s275 = sphi %s264, %s264
              %s276 = sphi %s266, %s266
            $region58: #{tpu_custom_call.1} parent=54 // loop_header_branch
              %273 = sbr.rel (%p271) target = $region62
            $region59: #{tpu_custom_call.1} parent=54 // loop_body
              %v277 = vld [vmem:[%s275] sm:%s268]
              %278 = vst [vmem:[%s276] sm:%s268] %v277
            $region60: #{tpu_custom_call.1} parent=54 // loop_footer
              %s274 = sadd.s32 1, %s270
            $region61: #{tpu_custom_call.1} parent=54 // loop_footer_branch
              %269 = sbr.rel target = $region57
            $region62: #{tpu_custom_call.1} parent=54 // loop_exit
              _
          $region55: #{tpu_custom_call.1} parent=39 // pred_fallthru
            _
        $region40: #{tpu_custom_call.1} parent=35 // pred_fallthru
          _
        // Predicated region
        $region41: #{tpu_custom_call.1} parent=35 // pred_check
          %p242 = pneg %p238
        $region42: #{tpu_custom_call.1} parent=35 // pred_check_branch
          %244 = sbr.rel (%p242) target = $region44
        $region43: #{tpu_custom_call.1} parent=35 // pred_region
          %s245 = sshll.u32 1, 4
          %s246 = ssub.s32 %s245, 1
          loop: start=0, step=1, limit=1
          $region45: #{tpu_custom_call.1} parent=43 // loop_pre_header
            _
          $region46: #{tpu_custom_call.1} parent=43 // loop_header
            %s248 = sphi 0, %s252
            %p249 = scmp.ge.s32.totalorder %s248, 1
            %s253 = sphi %s236, %s236
            %s254 = sphi [#allocation2], [#allocation2]
          $region47: #{tpu_custom_call.1} parent=43 // loop_header_branch
            %251 = sbr.rel (%p249) target = $region51
          $region48: #{tpu_custom_call.1} parent=43 // loop_body
            %v255 = vld [vmem:[%s253] sm:%s246]
            %256 = vst [vmem:[%s254] sm:%s246] %v255
          $region49: #{tpu_custom_call.1} parent=43 // loop_footer
            %s252 = sadd.s32 1, %s248
          $region50: #{tpu_custom_call.1} parent=43 // loop_footer_branch
            %247 = sbr.rel target = $region46
          $region51: #{tpu_custom_call.1} parent=43 // loop_exit
            _
        $region44: #{tpu_custom_call.1} parent=35 // pred_fallthru
          _
        // Predicated region
        $region63: #{tpu_custom_call.1} parent=35 // pred_check
          _
        $region64: #{tpu_custom_call.1} parent=35 // pred_check_branch
          %281 = sbr.rel (0) target = $region66
        $region65: #{tpu_custom_call.1} parent=35 // pred_region
          %282 = vsyncadd [#allocation3], 64
        $region66: #{tpu_custom_call.1} parent=35 // pred_fallthru
          _
        %v283 = vld [vmem:[%s3] sm:$0xff]
        %v284 = vld [vmem:[%s4] sm:$0xff]
        %v285 = vld [vmem:[%s5] sm:$0xff]
        %287 = vset.pattern.permute.xlu0 0
        %288 = vperm.xlu0 %287, %v285
        %v289 = vpop.permute.xlu0 %288
        %s291 = smul.u32 4, 1
        %s292 = smul.u32 %s291, 1
        %s293 = sshll.u32 %s292, 4
        %294 = dma.done [#allocation3], %s293
        %v295 = vld [vmem:[%s228] sm:$0xf]
        %v296 = vld [vmem:[#allocation2] sm:$0xf]
        %vm297 = vcmask 31744
        %v299 = vsel %vm297, %v284, 0
        %vm301 = vcmask 1043456
        %v303 = vsel %vm301, %v296, 0
        %305 = vmatprep.subr.mxu0 0.0
        %306 = vmatpush1.msra.mxu0 0.0
        %307 = vmatprep.subr.mxu0 0.0
        %308 = vmatpush1.msra.mxu0 0.0
        %309 = vmatprep.subr.mxu0 0.0
        %310 = vmatpush1.msra.mxu0 0.0
        %311 = vmatprep.subr.mxu0 0.0
        %312 = vmatpush1.msra.mxu0 0.0
        %313 = vmatprep.subr.mxu0 0.0
        %314 = vmatpush1.msra.mxu0 0.0
        %315 = vmatprep.subr.mxu0 0.0
        %316 = vmatpush1.msra.mxu0 0.0
        %317 = vmatprep.subr.mxu0 0.0
        %318 = vmatpush1.msra.mxu0 0.0
        %319 = vmatprep.subr.mxu0 0.0
        %320 = vmatpush1.msra.mxu0 0.0
        %321 = vmatprep.subr.mxu0 0.0
        %322 = vmatpush1.msra.mxu0 0.0
        %323 = vmatprep.subr.mxu0 0.0
        %324 = vmatpush1.msra.mxu0 0.0
        %325 = vmatprep.subr.mxu0 0.0
        %326 = vmatpush1.msra.mxu0 0.0
        %327 = vmatprep.subr.mxu0 0.0
        %328 = vmatpush1.msra.mxu0 0.0
        %329 = vmatprep.subr.mxu0 0.0
        %330 = vmatpush1.msra.mxu0 0.0
        %331 = vmatprep.subr.mxu0 0.0
        %332 = vmatpush1.msra.mxu0 0.0
        %333 = vmatprep.subr.mxu0 0.0
        %334 = vmatpush1.msra.mxu0 0.0
        %335 = vmatprep.subr.mxu0 0.0
        %v336 = vand.u32 %v303, 4294901760
        %337 = vmatpush1.msra.mxu0 %v336
        %338 = vmatprep.subr.mxu0 0.0
        %339 = vmatpush2.msra.mxu0 0.0
        %340 = vmatprep.subr.mxu0 0.0
        %341 = vmatpush2.msra.mxu0 0.0
        %342 = vmatprep.subr.mxu0 0.0
        %343 = vmatpush2.msra.mxu0 0.0
        %344 = vmatprep.subr.mxu0 0.0
        %345 = vmatpush2.msra.mxu0 0.0
        %346 = vmatprep.subr.mxu0 0.0
        %347 = vmatpush2.msra.mxu0 0.0
        %348 = vmatprep.subr.mxu0 0.0
        %349 = vmatpush2.msra.mxu0 0.0
        %350 = vmatprep.subr.mxu0 0.0
        %351 = vmatpush2.msra.mxu0 0.0
        %352 = vmatprep.subr.mxu0 0.0
        %353 = vmatpush2.msra.mxu0 0.0
        %354 = vmatprep.subr.mxu0 0.0
        %355 = vmatpush2.msra.mxu0 0.0
        %356 = vmatprep.subr.mxu0 0.0
        %357 = vmatpush2.msra.mxu0 0.0
        %358 = vmatprep.subr.mxu0 0.0
        %359 = vmatpush2.msra.mxu0 0.0
        %360 = vmatprep.subr.mxu0 0.0
        %361 = vmatpush2.msra.mxu0 0.0
        %362 = vmatprep.subr.mxu0 0.0
        %363 = vmatpush2.msra.mxu0 0.0
        %364 = vmatprep.subr.mxu0 0.0
        %365 = vmatpush2.msra.mxu0 0.0
        %366 = vmatprep.subr.mxu0 0.0
        %367 = vmatpush2.msra.mxu0 0.0
        %368 = vmatprep.subr.mxu0 0.0
        %369 = vmatpush2.msra.mxu0 0.0
        %370 = vmatprep.mubr.f32.mxu0 0.0
        %v371 = vand.u32 %v299, 4294901760
        %v372 = vsub.f32 %v299, %v371
        %v373 = vand.u32 %v372, 4294901760
        %v374 = vsub.f32 %v372, %v373
        %v375 = vand.u32 %v374, 4294901760
        %376 = vmatmul.mubr.f32.gmra.mxu0 %v375
        %v377 = vpop.f32.mrf.mxu0
        %v378 = vadd.f32 0.0, %v377
        %v379 = vpop.f32.mrf.mxu0
        %380 = vdwg.mxu0
        %381 = vmatprep.subr.mxu0 0.0
        %382 = vmatpush1.msra.mxu0 0.0
        %383 = vmatprep.subr.mxu0 0.0
        %384 = vmatpush1.msra.mxu0 0.0
        %385 = vmatprep.subr.mxu0 0.0
        %386 = vmatpush1.msra.mxu0 0.0
        %387 = vmatprep.subr.mxu0 0.0
        %388 = vmatpush1.msra.mxu0 0.0
        %389 = vmatprep.subr.mxu0 0.0
        %390 = vmatpush1.msra.mxu0 0.0
        %391 = vmatprep.subr.mxu0 0.0
        %392 = vmatpush1.msra.mxu0 0.0
        %393 = vmatprep.subr.mxu0 0.0
        %394 = vmatpush1.msra.mxu0 0.0
        %395 = vmatprep.subr.mxu0 0.0
        %396 = vmatpush1.msra.mxu0 0.0
        %397 = vmatprep.subr.mxu0 0.0
        %398 = vmatpush1.msra.mxu0 0.0
        %399 = vmatprep.subr.mxu0 0.0
        %400 = vmatpush1.msra.mxu0 0.0
        %401 = vmatprep.subr.mxu0 0.0
        %402 = vmatpush1.msra.mxu0 0.0
        %403 = vmatprep.subr.mxu0 0.0
        %404 = vmatpush1.msra.mxu0 0.0
        %405 = vmatprep.subr.mxu0 0.0
        %406 = vmatpush1.msra.mxu0 0.0
        %407 = vmatprep.subr.mxu0 0.0
        %408 = vmatpush1.msra.mxu0 0.0
        %409 = vmatprep.subr.mxu0 0.0
        %410 = vmatpush1.msra.mxu0 0.0
        %411 = vmatprep.subr.mxu0 0.0
        %v412 = vand.u32 %v303, 4294901760
        %v413 = vsub.f32 %v303, %v412
        %v414 = vand.u32 %v413, 4294901760
        %v415 = vsub.f32 %v413, %v414
        %v416 = vand.u32 %v415, 4294901760
        %417 = vmatpush1.msra.mxu0 %v416
        %418 = vmatprep.subr.mxu0 0.0
        %419 = vmatpush2.msra.mxu0 0.0
        %420 = vmatprep.subr.mxu0 0.0
        %421 = vmatpush2.msra.mxu0 0.0
        %422 = vmatprep.subr.mxu0 0.0
        %423 = vmatpush2.msra.mxu0 0.0
        %424 = vmatprep.subr.mxu0 0.0
        %425 = vmatpush2.msra.mxu0 0.0
        %426 = vmatprep.subr.mxu0 0.0
        %427 = vmatpush2.msra.mxu0 0.0
        %428 = vmatprep.subr.mxu0 0.0
        %429 = vmatpush2.msra.mxu0 0.0
        %430 = vmatprep.subr.mxu0 0.0
        %431 = vmatpush2.msra.mxu0 0.0
        %432 = vmatprep.subr.mxu0 0.0
        %433 = vmatpush2.msra.mxu0 0.0
        %434 = vmatprep.subr.mxu0 0.0
        %435 = vmatpush2.msra.mxu0 0.0
        %436 = vmatprep.subr.mxu0 0.0
        %437 = vmatpush2.msra.mxu0 0.0
        %438 = vmatprep.subr.mxu0 0.0
        %439 = vmatpush2.msra.mxu0 0.0
        %440 = vmatprep.subr.mxu0 0.0
        %441 = vmatpush2.msra.mxu0 0.0
        %442 = vmatprep.subr.mxu0 0.0
        %443 = vmatpush2.msra.mxu0 0.0
        %444 = vmatprep.subr.mxu0 0.0
        %445 = vmatpush2.msra.mxu0 0.0
        %446 = vmatprep.subr.mxu0 0.0
        %447 = vmatpush2.msra.mxu0 0.0
        %448 = vmatprep.subr.mxu0 0.0
        %449 = vmatpush2.msra.mxu0 0.0
        %450 = vmatprep.mubr.f32.mxu0 0.0
        %v451 = vand.u32 %v299, 4294901760
        %452 = vmatmul.mubr.f32.gmra.mxu0 %v451
        %v453 = vpop.f32.mrf.mxu0
        %v454 = vadd.f32 %v378, %v453
        %v455 = vpop.f32.mrf.mxu0
        %456 = vdwg.mxu0
        %457 = vmatprep.subr.mxu0 0.0
        %458 = vmatpush1.msra.mxu0 0.0
        %459 = vmatprep.subr.mxu0 0.0
        %460 = vmatpush1.msra.mxu0 0.0
        %461 = vmatprep.subr.mxu0 0.0
        %462 = vmatpush1.msra.mxu0 0.0
        %463 = vmatprep.subr.mxu0 0.0
        %464 = vmatpush1.msra.mxu0 0.0
        %465 = vmatprep.subr.mxu0 0.0
        %466 = vmatpush1.msra.mxu0 0.0
        %467 = vmatprep.subr.mxu0 0.0
        %468 = vmatpush1.msra.mxu0 0.0
        %469 = vmatprep.subr.mxu0 0.0
        %470 = vmatpush1.msra.mxu0 0.0
        %471 = vmatprep.subr.mxu0 0.0
        %472 = vmatpush1.msra.mxu0 0.0
        %473 = vmatprep.subr.mxu0 0.0
        %474 = vmatpush1.msra.mxu0 0.0
        %475 = vmatprep.subr.mxu0 0.0
        %476 = vmatpush1.msra.mxu0 0.0
        %477 = vmatprep.subr.mxu0 0.0
        %478 = vmatpush1.msra.mxu0 0.0
        %479 = vmatprep.subr.mxu0 0.0
        %480 = vmatpush1.msra.mxu0 0.0
        %481 = vmatprep.subr.mxu0 0.0
        %482 = vmatpush1.msra.mxu0 0.0
        %483 = vmatprep.subr.mxu0 0.0
        %484 = vmatpush1.msra.mxu0 0.0
        %485 = vmatprep.subr.mxu0 0.0
        %486 = vmatpush1.msra.mxu0 0.0
        %487 = vmatprep.subr.mxu0 0.0
        %v488 = vand.u32 %v303, 4294901760
        %v489 = vsub.f32 %v303, %v488
        %490 = vmatpush1.msra.mxu0 %v489
        %491 = vmatprep.subr.mxu0 0.0
        %492 = vmatpush2.msra.mxu0 0.0
        %493 = vmatprep.subr.mxu0 0.0
        %494 = vmatpush2.msra.mxu0 0.0
        %495 = vmatprep.subr.mxu0 0.0
        %496 = vmatpush2.msra.mxu0 0.0
        %497 = vmatprep.subr.mxu0 0.0
        %498 = vmatpush2.msra.mxu0 0.0
        %499 = vmatprep.subr.mxu0 0.0
        %500 = vmatpush2.msra.mxu0 0.0
        %501 = vmatprep.subr.mxu0 0.0
        %502 = vmatpush2.msra.mxu0 0.0
        %503 = vmatprep.subr.mxu0 0.0
        %504 = vmatpush2.msra.mxu0 0.0
        %505 = vmatprep.subr.mxu0 0.0
        %506 = vmatpush2.msra.mxu0 0.0
        %507 = vmatprep.subr.mxu0 0.0
        %508 = vmatpush2.msra.mxu0 0.0
        %509 = vmatprep.subr.mxu0 0.0
        %510 = vmatpush2.msra.mxu0 0.0
        %511 = vmatprep.subr.mxu0 0.0
        %512 = vmatpush2.msra.mxu0 0.0
        %513 = vmatprep.subr.mxu0 0.0
        %514 = vmatpush2.msra.mxu0 0.0
        %515 = vmatprep.subr.mxu0 0.0
        %516 = vmatpush2.msra.mxu0 0.0
        %517 = vmatprep.subr.mxu0 0.0
        %518 = vmatpush2.msra.mxu0 0.0
        %519 = vmatprep.subr.mxu0 0.0
        %520 = vmatpush2.msra.mxu0 0.0
        %521 = vmatprep.subr.mxu0 0.0
        %522 = vmatpush2.msra.mxu0 0.0
        %523 = vmatprep.mubr.f32.mxu0 0.0
        %v524 = vand.u32 %v299, 4294901760
        %v525 = vsub.f32 %v299, %v524
        %526 = vmatmul.mubr.f32.gmra.mxu0 %v525
        %v527 = vpop.f32.mrf.mxu0
        %v528 = vadd.f32 %v454, %v527
        %v529 = vpop.f32.mrf.mxu0
        %530 = vdwg.mxu0
        %531 = vmatprep.subr.mxu0 0.0
        %532 = vmatpush1.msra.mxu0 0.0
        %533 = vmatprep.subr.mxu0 0.0
        %534 = vmatpush1.msra.mxu0 0.0
        %535 = vmatprep.subr.mxu0 0.0
        %536 = vmatpush1.msra.mxu0 0.0
        %537 = vmatprep.subr.mxu0 0.0
        %538 = vmatpush1.msra.mxu0 0.0
        %539 = vmatprep.subr.mxu0 0.0
        %540 = vmatpush1.msra.mxu0 0.0
        %541 = vmatprep.subr.mxu0 0.0
        %542 = vmatpush1.msra.mxu0 0.0
        %543 = vmatprep.subr.mxu0 0.0
        %544 = vmatpush1.msra.mxu0 0.0
        %545 = vmatprep.subr.mxu0 0.0
        %546 = vmatpush1.msra.mxu0 0.0
        %547 = vmatprep.subr.mxu0 0.0
        %548 = vmatpush1.msra.mxu0 0.0
        %549 = vmatprep.subr.mxu0 0.0
        %550 = vmatpush1.msra.mxu0 0.0
        %551 = vmatprep.subr.mxu0 0.0
        %552 = vmatpush1.msra.mxu0 0.0
        %553 = vmatprep.subr.mxu0 0.0
        %554 = vmatpush1.msra.mxu0 0.0
        %555 = vmatprep.subr.mxu0 0.0
        %556 = vmatpush1.msra.mxu0 0.0
        %557 = vmatprep.subr.mxu0 0.0
        %558 = vmatpush1.msra.mxu0 0.0
        %559 = vmatprep.subr.mxu0 0.0
        %560 = vmatpush1.msra.mxu0 0.0
        %561 = vmatprep.subr.mxu0 0.0
        %v562 = vand.u32 %v303, 4294901760
        %563 = vmatpush1.msra.mxu0 %v562
        %564 = vmatprep.subr.mxu0 0.0
        %565 = vmatpush2.msra.mxu0 0.0
        %566 = vmatprep.subr.mxu0 0.0
        %567 = vmatpush2.msra.mxu0 0.0
        %568 = vmatprep.subr.mxu0 0.0
        %569 = vmatpush2.msra.mxu0 0.0
        %570 = vmatprep.subr.mxu0 0.0
        %571 = vmatpush2.msra.mxu0 0.0
        %572 = vmatprep.subr.mxu0 0.0
        %573 = vmatpush2.msra.mxu0 0.0
        %574 = vmatprep.subr.mxu0 0.0
        %575 = vmatpush2.msra.mxu0 0.0
        %576 = vmatprep.subr.mxu0 0.0
        %577 = vmatpush2.msra.mxu0 0.0
        %578 = vmatprep.subr.mxu0 0.0
        %579 = vmatpush2.msra.mxu0 0.0
        %580 = vmatprep.subr.mxu0 0.0
        %581 = vmatpush2.msra.mxu0 0.0
        %582 = vmatprep.subr.mxu0 0.0
        %583 = vmatpush2.msra.mxu0 0.0
        %584 = vmatprep.subr.mxu0 0.0
        %585 = vmatpush2.msra.mxu0 0.0
        %586 = vmatprep.subr.mxu0 0.0
        %587 = vmatpush2.msra.mxu0 0.0
        %588 = vmatprep.subr.mxu0 0.0
        %589 = vmatpush2.msra.mxu0 0.0
        %590 = vmatprep.subr.mxu0 0.0
        %591 = vmatpush2.msra.mxu0 0.0
        %592 = vmatprep.subr.mxu0 0.0
        %593 = vmatpush2.msra.mxu0 0.0
        %594 = vmatprep.subr.mxu0 0.0
        %595 = vmatpush2.msra.mxu0 0.0
        %596 = vmatprep.mubr.f32.mxu0 0.0
        %v597 = vand.u32 %v299, 4294901760
        %v598 = vsub.f32 %v299, %v597
        %v599 = vand.u32 %v598, 4294901760
        %600 = vmatmul.mubr.f32.gmra.mxu0 %v599
        %v601 = vpop.f32.mrf.mxu0
        %v602 = vadd.f32 %v528, %v601
        %v603 = vpop.f32.mrf.mxu0
        %604 = vdwg.mxu0
        %605 = vmatprep.subr.mxu0 0.0
        %606 = vmatpush1.msra.mxu0 0.0
        %607 = vmatprep.subr.mxu0 0.0
        %608 = vmatpush1.msra.mxu0 0.0
        %609 = vmatprep.subr.mxu0 0.0
        %610 = vmatpush1.msra.mxu0 0.0
        %611 = vmatprep.subr.mxu0 0.0
        %612 = vmatpush1.msra.mxu0 0.0
        %613 = vmatprep.subr.mxu0 0.0
        %614 = vmatpush1.msra.mxu0 0.0
        %615 = vmatprep.subr.mxu0 0.0
        %616 = vmatpush1.msra.mxu0 0.0
        %617 = vmatprep.subr.mxu0 0.0
        %618 = vmatpush1.msra.mxu0 0.0
        %619 = vmatprep.subr.mxu0 0.0
        %620 = vmatpush1.msra.mxu0 0.0
        %621 = vmatprep.subr.mxu0 0.0
        %622 = vmatpush1.msra.mxu0 0.0
        %623 = vmatprep.subr.mxu0 0.0
        %624 = vmatpush1.msra.mxu0 0.0
        %625 = vmatprep.subr.mxu0 0.0
        %626 = vmatpush1.msra.mxu0 0.0
        %627 = vmatprep.subr.mxu0 0.0
        %628 = vmatpush1.msra.mxu0 0.0
        %629 = vmatprep.subr.mxu0 0.0
        %630 = vmatpush1.msra.mxu0 0.0
        %631 = vmatprep.subr.mxu0 0.0
        %632 = vmatpush1.msra.mxu0 0.0
        %633 = vmatprep.subr.mxu0 0.0
        %634 = vmatpush1.msra.mxu0 0.0
        %635 = vmatprep.subr.mxu0 0.0
        %v636 = vand.u32 %v303, 4294901760
        %v637 = vsub.f32 %v303, %v636
        %v638 = vand.u32 %v637, 4294901760
        %639 = vmatpush1.msra.mxu0 %v638
        %640 = vmatprep.subr.mxu0 0.0
        %641 = vmatpush2.msra.mxu0 0.0
        %642 = vmatprep.subr.mxu0 0.0
        %643 = vmatpush2.msra.mxu0 0.0
        %644 = vmatprep.subr.mxu0 0.0
        %645 = vmatpush2.msra.mxu0 0.0
        %646 = vmatprep.subr.mxu0 0.0
        %647 = vmatpush2.msra.mxu0 0.0
        %648 = vmatprep.subr.mxu0 0.0
        %649 = vmatpush2.msra.mxu0 0.0
        %650 = vmatprep.subr.mxu0 0.0
        %651 = vmatpush2.msra.mxu0 0.0
        %652 = vmatprep.subr.mxu0 0.0
        %653 = vmatpush2.msra.mxu0 0.0
        %654 = vmatprep.subr.mxu0 0.0
        %655 = vmatpush2.msra.mxu0 0.0
        %656 = vmatprep.subr.mxu0 0.0
        %657 = vmatpush2.msra.mxu0 0.0
        %658 = vmatprep.subr.mxu0 0.0
        %659 = vmatpush2.msra.mxu0 0.0
        %660 = vmatprep.subr.mxu0 0.0
        %661 = vmatpush2.msra.mxu0 0.0
        %662 = vmatprep.subr.mxu0 0.0
        %663 = vmatpush2.msra.mxu0 0.0
        %664 = vmatprep.subr.mxu0 0.0
        %665 = vmatpush2.msra.mxu0 0.0
        %666 = vmatprep.subr.mxu0 0.0
        %667 = vmatpush2.msra.mxu0 0.0
        %668 = vmatprep.subr.mxu0 0.0
        %669 = vmatpush2.msra.mxu0 0.0
        %670 = vmatprep.subr.mxu0 0.0
        %671 = vmatpush2.msra.mxu0 0.0
        %672 = vmatprep.mubr.f32.mxu0 0.0
        %v673 = vand.u32 %v299, 4294901760
        %674 = vmatmul.mubr.f32.gmra.mxu0 %v673
        %v675 = vpop.f32.mrf.mxu0
        %v676 = vadd.f32 %v602, %v675
        %v677 = vpop.f32.mrf.mxu0
        %678 = vdwg.mxu0
        %679 = vmatprep.subr.mxu0 0.0
        %680 = vmatpush1.msra.mxu0 0.0
        %681 = vmatprep.subr.mxu0 0.0
        %682 = vmatpush1.msra.mxu0 0.0
        %683 = vmatprep.subr.mxu0 0.0
        %684 = vmatpush1.msra.mxu0 0.0
        %685 = vmatprep.subr.mxu0 0.0
        %686 = vmatpush1.msra.mxu0 0.0
        %687 = vmatprep.subr.mxu0 0.0
        %688 = vmatpush1.msra.mxu0 0.0
        %689 = vmatprep.subr.mxu0 0.0
        %690 = vmatpush1.msra.mxu0 0.0
        %691 = vmatprep.subr.mxu0 0.0
        %692 = vmatpush1.msra.mxu0 0.0
        %693 = vmatprep.subr.mxu0 0.0
        %694 = vmatpush1.msra.mxu0 0.0
        %695 = vmatprep.subr.mxu0 0.0
        %696 = vmatpush1.msra.mxu0 0.0
        %697 = vmatprep.subr.mxu0 0.0
        %698 = vmatpush1.msra.mxu0 0.0
        %699 = vmatprep.subr.mxu0 0.0
        %700 = vmatpush1.msra.mxu0 0.0
        %701 = vmatprep.subr.mxu0 0.0
        %702 = vmatpush1.msra.mxu0 0.0
        %703 = vmatprep.subr.mxu0 0.0
        %704 = vmatpush1.msra.mxu0 0.0
        %705 = vmatprep.subr.mxu0 0.0
        %706 = vmatpush1.msra.mxu0 0.0
        %707 = vmatprep.subr.mxu0 0.0
        %708 = vmatpush1.msra.mxu0 0.0
        %709 = vmatprep.subr.mxu0 0.0
        %v710 = vand.u32 %v303, 4294901760
        %711 = vmatpush1.msra.mxu0 %v710
        %712 = vmatprep.subr.mxu0 0.0
        %713 = vmatpush2.msra.mxu0 0.0
        %714 = vmatprep.subr.mxu0 0.0
        %715 = vmatpush2.msra.mxu0 0.0
        %716 = vmatprep.subr.mxu0 0.0
        %717 = vmatpush2.msra.mxu0 0.0
        %718 = vmatprep.subr.mxu0 0.0
        %719 = vmatpush2.msra.mxu0 0.0
        %720 = vmatprep.subr.mxu0 0.0
        %721 = vmatpush2.msra.mxu0 0.0
        %722 = vmatprep.subr.mxu0 0.0
        %723 = vmatpush2.msra.mxu0 0.0
        %724 = vmatprep.subr.mxu0 0.0
        %725 = vmatpush2.msra.mxu0 0.0
        %726 = vmatprep.subr.mxu0 0.0
        %727 = vmatpush2.msra.mxu0 0.0
        %728 = vmatprep.subr.mxu0 0.0
        %729 = vmatpush2.msra.mxu0 0.0
        %730 = vmatprep.subr.mxu0 0.0
        %731 = vmatpush2.msra.mxu0 0.0
        %732 = vmatprep.subr.mxu0 0.0
        %733 = vmatpush2.msra.mxu0 0.0
        %734 = vmatprep.subr.mxu0 0.0
        %735 = vmatpush2.msra.mxu0 0.0
        %736 = vmatprep.subr.mxu0 0.0
        %737 = vmatpush2.msra.mxu0 0.0
        %738 = vmatprep.subr.mxu0 0.0
        %739 = vmatpush2.msra.mxu0 0.0
        %740 = vmatprep.subr.mxu0 0.0
        %741 = vmatpush2.msra.mxu0 0.0
        %742 = vmatprep.subr.mxu0 0.0
        %743 = vmatpush2.msra.mxu0 0.0
        %744 = vmatprep.mubr.f32.mxu0 0.0
        %v745 = vand.u32 %v299, 4294901760
        %746 = vmatmul.mubr.f32.gmra.mxu0 %v745
        %v747 = vpop.f32.mrf.mxu0
        %v748 = vadd.f32 %v676, %v747
        %v749 = vpop.f32.mrf.mxu0
        %750 = vdwg.mxu0
        %v752 = vsel %vm297, %v283, 0
        %v755 = vsel %vm301, %v295, 0
        %757 = vmatprep.subr.mxu0 0.0
        %758 = vmatpush1.msra.mxu0 0.0
        %759 = vmatprep.subr.mxu0 0.0
        %760 = vmatpush1.msra.mxu0 0.0
        %761 = vmatprep.subr.mxu0 0.0
        %762 = vmatpush1.msra.mxu0 0.0
        %763 = vmatprep.subr.mxu0 0.0
        %764 = vmatpush1.msra.mxu0 0.0
        %765 = vmatprep.subr.mxu0 0.0
        %766 = vmatpush1.msra.mxu0 0.0
        %767 = vmatprep.subr.mxu0 0.0
        %768 = vmatpush1.msra.mxu0 0.0
        %769 = vmatprep.subr.mxu0 0.0
        %770 = vmatpush1.msra.mxu0 0.0
        %771 = vmatprep.subr.mxu0 0.0
        %772 = vmatpush1.msra.mxu0 0.0
        %773 = vmatprep.subr.mxu0 0.0
        %774 = vmatpush1.msra.mxu0 0.0
        %775 = vmatprep.subr.mxu0 0.0
        %776 = vmatpush1.msra.mxu0 0.0
        %777 = vmatprep.subr.mxu0 0.0
        %778 = vmatpush1.msra.mxu0 0.0
        %779 = vmatprep.subr.mxu0 0.0
        %780 = vmatpush1.msra.mxu0 0.0
        %781 = vmatprep.subr.mxu0 0.0
        %782 = vmatpush1.msra.mxu0 0.0
        %783 = vmatprep.subr.mxu0 0.0
        %784 = vmatpush1.msra.mxu0 0.0
        %785 = vmatprep.subr.mxu0 0.0
        %786 = vmatpush1.msra.mxu0 0.0
        %787 = vmatprep.subr.mxu0 0.0
        %v788 = vand.u32 %v755, 4294901760
        %789 = vmatpush1.msra.mxu0 %v788
        %790 = vmatprep.subr.mxu0 0.0
        %791 = vmatpush2.msra.mxu0 0.0
        %792 = vmatprep.subr.mxu0 0.0
        %793 = vmatpush2.msra.mxu0 0.0
        %794 = vmatprep.subr.mxu0 0.0
        %795 = vmatpush2.msra.mxu0 0.0
        %796 = vmatprep.subr.mxu0 0.0
        %797 = vmatpush2.msra.mxu0 0.0
        %798 = vmatprep.subr.mxu0 0.0
        %799 = vmatpush2.msra.mxu0 0.0
        %800 = vmatprep.subr.mxu0 0.0
        %801 = vmatpush2.msra.mxu0 0.0
        %802 = vmatprep.subr.mxu0 0.0
        %803 = vmatpush2.msra.mxu0 0.0
        %804 = vmatprep.subr.mxu0 0.0
        %805 = vmatpush2.msra.mxu0 0.0
        %806 = vmatprep.subr.mxu0 0.0
        %807 = vmatpush2.msra.mxu0 0.0
        %808 = vmatprep.subr.mxu0 0.0
        %809 = vmatpush2.msra.mxu0 0.0
        %810 = vmatprep.subr.mxu0 0.0
        %811 = vmatpush2.msra.mxu0 0.0
        %812 = vmatprep.subr.mxu0 0.0
        %813 = vmatpush2.msra.mxu0 0.0
        %814 = vmatprep.subr.mxu0 0.0
        %815 = vmatpush2.msra.mxu0 0.0
        %816 = vmatprep.subr.mxu0 0.0
        %817 = vmatpush2.msra.mxu0 0.0
        %818 = vmatprep.subr.mxu0 0.0
        %819 = vmatpush2.msra.mxu0 0.0
        %820 = vmatprep.subr.mxu0 0.0
        %821 = vmatpush2.msra.mxu0 0.0
        %822 = vmatprep.mubr.f32.mxu0 0.0
        %v823 = vand.u32 %v752, 4294901760
        %v824 = vsub.f32 %v752, %v823
        %v825 = vand.u32 %v824, 4294901760
        %v826 = vsub.f32 %v824, %v825
        %v827 = vand.u32 %v826, 4294901760
        %828 = vmatmul.mubr.f32.gmra.mxu0 %v827
        %v829 = vpop.f32.mrf.mxu0
        %v830 = vadd.f32 %v748, %v829
        %v831 = vpop.f32.mrf.mxu0
        %832 = vdwg.mxu0
        %833 = vmatprep.subr.mxu0 0.0
        %834 = vmatpush1.msra.mxu0 0.0
        %835 = vmatprep.subr.mxu0 0.0
        %836 = vmatpush1.msra.mxu0 0.0
        %837 = vmatprep.subr.mxu0 0.0
        %838 = vmatpush1.msra.mxu0 0.0
        %839 = vmatprep.subr.mxu0 0.0
        %840 = vmatpush1.msra.mxu0 0.0
        %841 = vmatprep.subr.mxu0 0.0
        %842 = vmatpush1.msra.mxu0 0.0
        %843 = vmatprep.subr.mxu0 0.0
        %844 = vmatpush1.msra.mxu0 0.0
        %845 = vmatprep.subr.mxu0 0.0
        %846 = vmatpush1.msra.mxu0 0.0
        %847 = vmatprep.subr.mxu0 0.0
        %848 = vmatpush1.msra.mxu0 0.0
        %849 = vmatprep.subr.mxu0 0.0
        %850 = vmatpush1.msra.mxu0 0.0
        %851 = vmatprep.subr.mxu0 0.0
        %852 = vmatpush1.msra.mxu0 0.0
        %853 = vmatprep.subr.mxu0 0.0
        %854 = vmatpush1.msra.mxu0 0.0
        %855 = vmatprep.subr.mxu0 0.0
        %856 = vmatpush1.msra.mxu0 0.0
        %857 = vmatprep.subr.mxu0 0.0
        %858 = vmatpush1.msra.mxu0 0.0
        %859 = vmatprep.subr.mxu0 0.0
        %860 = vmatpush1.msra.mxu0 0.0
        %861 = vmatprep.subr.mxu0 0.0
        %862 = vmatpush1.msra.mxu0 0.0
        %863 = vmatprep.subr.mxu0 0.0
        %v864 = vand.u32 %v755, 4294901760
        %v865 = vsub.f32 %v755, %v864
        %v866 = vand.u32 %v865, 4294901760
        %v867 = vsub.f32 %v865, %v866
        %v868 = vand.u32 %v867, 4294901760
        %869 = vmatpush1.msra.mxu0 %v868
        %870 = vmatprep.subr.mxu0 0.0
        %871 = vmatpush2.msra.mxu0 0.0
        %872 = vmatprep.subr.mxu0 0.0
        %873 = vmatpush2.msra.mxu0 0.0
        %874 = vmatprep.subr.mxu0 0.0
        %875 = vmatpush2.msra.mxu0 0.0
        %876 = vmatprep.subr.mxu0 0.0
        %877 = vmatpush2.msra.mxu0 0.0
        %878 = vmatprep.subr.mxu0 0.0
        %879 = vmatpush2.msra.mxu0 0.0
        %880 = vmatprep.subr.mxu0 0.0
        %881 = vmatpush2.msra.mxu0 0.0
        %882 = vmatprep.subr.mxu0 0.0
        %883 = vmatpush2.msra.mxu0 0.0
        %884 = vmatprep.subr.mxu0 0.0
        %885 = vmatpush2.msra.mxu0 0.0
        %886 = vmatprep.subr.mxu0 0.0
        %887 = vmatpush2.msra.mxu0 0.0
        %888 = vmatprep.subr.mxu0 0.0
        %889 = vmatpush2.msra.mxu0 0.0
        %890 = vmatprep.subr.mxu0 0.0
        %891 = vmatpush2.msra.mxu0 0.0
        %892 = vmatprep.subr.mxu0 0.0
        %893 = vmatpush2.msra.mxu0 0.0
        %894 = vmatprep.subr.mxu0 0.0
        %895 = vmatpush2.msra.mxu0 0.0
        %896 = vmatprep.subr.mxu0 0.0
        %897 = vmatpush2.msra.mxu0 0.0
        %898 = vmatprep.subr.mxu0 0.0
        %899 = vmatpush2.msra.mxu0 0.0
        %900 = vmatprep.subr.mxu0 0.0
        %901 = vmatpush2.msra.mxu0 0.0
        %902 = vmatprep.mubr.f32.mxu0 0.0
        %v903 = vand.u32 %v752, 4294901760
        %904 = vmatmul.mubr.f32.gmra.mxu0 %v903
        %v905 = vpop.f32.mrf.mxu0
        %v906 = vadd.f32 %v830, %v905
        %v907 = vpop.f32.mrf.mxu0
        %908 = vdwg.mxu0
        %909 = vmatprep.subr.mxu0 0.0
        %910 = vmatpush1.msra.mxu0 0.0
        %911 = vmatprep.subr.mxu0 0.0
        %912 = vmatpush1.msra.mxu0 0.0
        %913 = vmatprep.subr.mxu0 0.0
        %914 = vmatpush1.msra.mxu0 0.0
        %915 = vmatprep.subr.mxu0 0.0
        %916 = vmatpush1.msra.mxu0 0.0
        %917 = vmatprep.subr.mxu0 0.0
        %918 = vmatpush1.msra.mxu0 0.0
        %919 = vmatprep.subr.mxu0 0.0
        %920 = vmatpush1.msra.mxu0 0.0
        %921 = vmatprep.subr.mxu0 0.0
        %922 = vmatpush1.msra.mxu0 0.0
        %923 = vmatprep.subr.mxu0 0.0
        %924 = vmatpush1.msra.mxu0 0.0
        %925 = vmatprep.subr.mxu0 0.0
        %926 = vmatpush1.msra.mxu0 0.0
        %927 = vmatprep.subr.mxu0 0.0
        %928 = vmatpush1.msra.mxu0 0.0
        %929 = vmatprep.subr.mxu0 0.0
        %930 = vmatpush1.msra.mxu0 0.0
        %931 = vmatprep.subr.mxu0 0.0
        %932 = vmatpush1.msra.mxu0 0.0
        %933 = vmatprep.subr.mxu0 0.0
        %934 = vmatpush1.msra.mxu0 0.0
        %935 = vmatprep.subr.mxu0 0.0
        %936 = vmatpush1.msra.mxu0 0.0
        %937 = vmatprep.subr.mxu0 0.0
        %938 = vmatpush1.msra.mxu0 0.0
        %939 = vmatprep.subr.mxu0 0.0
        %v940 = vand.u32 %v755, 4294901760
        %v941 = vsub.f32 %v755, %v940
        %942 = vmatpush1.msra.mxu0 %v941
        %943 = vmatprep.subr.mxu0 0.0
        %944 = vmatpush2.msra.mxu0 0.0
        %945 = vmatprep.subr.mxu0 0.0
        %946 = vmatpush2.msra.mxu0 0.0
        %947 = vmatprep.subr.mxu0 0.0
        %948 = vmatpush2.msra.mxu0 0.0
        %949 = vmatprep.subr.mxu0 0.0
        %950 = vmatpush2.msra.mxu0 0.0
        %951 = vmatprep.subr.mxu0 0.0
        %952 = vmatpush2.msra.mxu0 0.0
        %953 = vmatprep.subr.mxu0 0.0
        %954 = vmatpush2.msra.mxu0 0.0
        %955 = vmatprep.subr.mxu0 0.0
        %956 = vmatpush2.msra.mxu0 0.0
        %957 = vmatprep.subr.mxu0 0.0
        %958 = vmatpush2.msra.mxu0 0.0
        %959 = vmatprep.subr.mxu0 0.0
        %960 = vmatpush2.msra.mxu0 0.0
        %961 = vmatprep.subr.mxu0 0.0
        %962 = vmatpush2.msra.mxu0 0.0
        %963 = vmatprep.subr.mxu0 0.0
        %964 = vmatpush2.msra.mxu0 0.0
        %965 = vmatprep.subr.mxu0 0.0
        %966 = vmatpush2.msra.mxu0 0.0
        %967 = vmatprep.subr.mxu0 0.0
        %968 = vmatpush2.msra.mxu0 0.0
        %969 = vmatprep.subr.mxu0 0.0
        %970 = vmatpush2.msra.mxu0 0.0
        %971 = vmatprep.subr.mxu0 0.0
        %972 = vmatpush2.msra.mxu0 0.0
        %973 = vmatprep.subr.mxu0 0.0
        %974 = vmatpush2.msra.mxu0 0.0
        %975 = vmatprep.mubr.f32.mxu0 0.0
        %v976 = vand.u32 %v752, 4294901760
        %v977 = vsub.f32 %v752, %v976
        %978 = vmatmul.mubr.f32.gmra.mxu0 %v977
        %v979 = vpop.f32.mrf.mxu0
        %v980 = vadd.f32 %v906, %v979
        %v981 = vpop.f32.mrf.mxu0
        %982 = vdwg.mxu0
        %983 = vmatprep.subr.mxu0 0.0
        %984 = vmatpush1.msra.mxu0 0.0
        %985 = vmatprep.subr.mxu0 0.0
        %986 = vmatpush1.msra.mxu0 0.0
        %987 = vmatprep.subr.mxu0 0.0
        %988 = vmatpush1.msra.mxu0 0.0
        %989 = vmatprep.subr.mxu0 0.0
        %990 = vmatpush1.msra.mxu0 0.0
        %991 = vmatprep.subr.mxu0 0.0
        %992 = vmatpush1.msra.mxu0 0.0
        %993 = vmatprep.subr.mxu0 0.0
        %994 = vmatpush1.msra.mxu0 0.0
        %995 = vmatprep.subr.mxu0 0.0
        %996 = vmatpush1.msra.mxu0 0.0
        %997 = vmatprep.subr.mxu0 0.0
        %998 = vmatpush1.msra.mxu0 0.0
        %999 = vmatprep.subr.mxu0 0.0
        %1000 = vmatpush1.msra.mxu0 0.0
        %1001 = vmatprep.subr.mxu0 0.0
        %1002 = vmatpush1.msra.mxu0 0.0
        %1003 = vmatprep.subr.mxu0 0.0
        %1004 = vmatpush1.msra.mxu0 0.0
        %1005 = vmatprep.subr.mxu0 0.0
        %1006 = vmatpush1.msra.mxu0 0.0
        %1007 = vmatprep.subr.mxu0 0.0
        %1008 = vmatpush1.msra.mxu0 0.0
        %1009 = vmatprep.subr.mxu0 0.0
        %1010 = vmatpush1.msra.mxu0 0.0
        %1011 = vmatprep.subr.mxu0 0.0
        %1012 = vmatpush1.msra.mxu0 0.0
        %1013 = vmatprep.subr.mxu0 0.0
        %v1014 = vand.u32 %v755, 4294901760
        %1015 = vmatpush1.msra.mxu0 %v1014
        %1016 = vmatprep.subr.mxu0 0.0
        %1017 = vmatpush2.msra.mxu0 0.0
        %1018 = vmatprep.subr.mxu0 0.0
        %1019 = vmatpush2.msra.mxu0 0.0
        %1020 = vmatprep.subr.mxu0 0.0
        %1021 = vmatpush2.msra.mxu0 0.0
        %1022 = vmatprep.subr.mxu0 0.0
        %1023 = vmatpush2.msra.mxu0 0.0
        %1024 = vmatprep.subr.mxu0 0.0
        %1025 = vmatpush2.msra.mxu0 0.0
        %1026 = vmatprep.subr.mxu0 0.0
        %1027 = vmatpush2.msra.mxu0 0.0
        %1028 = vmatprep.subr.mxu0 0.0
        %1029 = vmatpush2.msra.mxu0 0.0
        %1030 = vmatprep.subr.mxu0 0.0
        %1031 = vmatpush2.msra.mxu0 0.0
        %1032 = vmatprep.subr.mxu0 0.0
        %1033 = vmatpush2.msra.mxu0 0.0
        %1034 = vmatprep.subr.mxu0 0.0
        %1035 = vmatpush2.msra.mxu0 0.0
        %1036 = vmatprep.subr.mxu0 0.0
        %1037 = vmatpush2.msra.mxu0 0.0
        %1038 = vmatprep.subr.mxu0 0.0
        %1039 = vmatpush2.msra.mxu0 0.0
        %1040 = vmatprep.subr.mxu0 0.0
        %1041 = vmatpush2.msra.mxu0 0.0
        %1042 = vmatprep.subr.mxu0 0.0
        %1043 = vmatpush2.msra.mxu0 0.0
        %1044 = vmatprep.subr.mxu0 0.0
        %1045 = vmatpush2.msra.mxu0 0.0
        %1046 = vmatprep.subr.mxu0 0.0
        %1047 = vmatpush2.msra.mxu0 0.0
        %1048 = vmatprep.mubr.f32.mxu0 0.0
        %v1049 = vand.u32 %v752, 4294901760
        %v1050 = vsub.f32 %v752, %v1049
        %v1051 = vand.u32 %v1050, 4294901760
        %1052 = vmatmul.mubr.f32.gmra.mxu0 %v1051
        %v1053 = vpop.f32.mrf.mxu0
        %v1054 = vadd.f32 %v980, %v1053
        %v1055 = vpop.f32.mrf.mxu0
        %1056 = vdwg.mxu0
        %1057 = vmatprep.subr.mxu0 0.0
        %1058 = vmatpush1.msra.mxu0 0.0
        %1059 = vmatprep.subr.mxu0 0.0
        %1060 = vmatpush1.msra.mxu0 0.0
        %1061 = vmatprep.subr.mxu0 0.0
        %1062 = vmatpush1.msra.mxu0 0.0
        %1063 = vmatprep.subr.mxu0 0.0
        %1064 = vmatpush1.msra.mxu0 0.0
        %1065 = vmatprep.subr.mxu0 0.0
        %1066 = vmatpush1.msra.mxu0 0.0
        %1067 = vmatprep.subr.mxu0 0.0
        %1068 = vmatpush1.msra.mxu0 0.0
        %1069 = vmatprep.subr.mxu0 0.0
        %1070 = vmatpush1.msra.mxu0 0.0
        %1071 = vmatprep.subr.mxu0 0.0
        %1072 = vmatpush1.msra.mxu0 0.0
        %1073 = vmatprep.subr.mxu0 0.0
        %1074 = vmatpush1.msra.mxu0 0.0
        %1075 = vmatprep.subr.mxu0 0.0
        %1076 = vmatpush1.msra.mxu0 0.0
        %1077 = vmatprep.subr.mxu0 0.0
        %1078 = vmatpush1.msra.mxu0 0.0
        %1079 = vmatprep.subr.mxu0 0.0
        %1080 = vmatpush1.msra.mxu0 0.0
        %1081 = vmatprep.subr.mxu0 0.0
        %1082 = vmatpush1.msra.mxu0 0.0
        %1083 = vmatprep.subr.mxu0 0.0
        %1084 = vmatpush1.msra.mxu0 0.0
        %1085 = vmatprep.subr.mxu0 0.0
        %1086 = vmatpush1.msra.mxu0 0.0
        %1087 = vmatprep.subr.mxu0 0.0
        %v1088 = vand.u32 %v755, 4294901760
        %v1089 = vsub.f32 %v755, %v1088
        %v1090 = vand.u32 %v1089, 4294901760
        %1091 = vmatpush1.msra.mxu0 %v1090
        %1092 = vmatprep.subr.mxu0 0.0
        %1093 = vmatpush2.msra.mxu0 0.0
        %1094 = vmatprep.subr.mxu0 0.0
        %1095 = vmatpush2.msra.mxu0 0.0
        %1096 = vmatprep.subr.mxu0 0.0
        %1097 = vmatpush2.msra.mxu0 0.0
        %1098 = vmatprep.subr.mxu0 0.0
        %1099 = vmatpush2.msra.mxu0 0.0
        %1100 = vmatprep.subr.mxu0 0.0
        %1101 = vmatpush2.msra.mxu0 0.0
        %1102 = vmatprep.subr.mxu0 0.0
        %1103 = vmatpush2.msra.mxu0 0.0
        %1104 = vmatprep.subr.mxu0 0.0
        %1105 = vmatpush2.msra.mxu0 0.0
        %1106 = vmatprep.subr.mxu0 0.0
        %1107 = vmatpush2.msra.mxu0 0.0
        %1108 = vmatprep.subr.mxu0 0.0
        %1109 = vmatpush2.msra.mxu0 0.0
        %1110 = vmatprep.subr.mxu0 0.0
        %1111 = vmatpush2.msra.mxu0 0.0
        %1112 = vmatprep.subr.mxu0 0.0
        %1113 = vmatpush2.msra.mxu0 0.0
        %1114 = vmatprep.subr.mxu0 0.0
        %1115 = vmatpush2.msra.mxu0 0.0
        %1116 = vmatprep.subr.mxu0 0.0
        %1117 = vmatpush2.msra.mxu0 0.0
        %1118 = vmatprep.subr.mxu0 0.0
        %1119 = vmatpush2.msra.mxu0 0.0
        %1120 = vmatprep.subr.mxu0 0.0
        %1121 = vmatpush2.msra.mxu0 0.0
        %1122 = vmatprep.subr.mxu0 0.0
        %1123 = vmatpush2.msra.mxu0 0.0
        %1124 = vmatprep.mubr.f32.mxu0 0.0
        %v1125 = vand.u32 %v752, 4294901760
        %1126 = vmatmul.mubr.f32.gmra.mxu0 %v1125
        %v1127 = vpop.f32.mrf.mxu0
        %v1128 = vadd.f32 %v1054, %v1127
        %v1129 = vpop.f32.mrf.mxu0
        %1130 = vdwg.mxu0
        %1131 = vmatprep.subr.mxu0 0.0
        %1132 = vmatpush1.msra.mxu0 0.0
        %1133 = vmatprep.subr.mxu0 0.0
        %1134 = vmatpush1.msra.mxu0 0.0
        %1135 = vmatprep.subr.mxu0 0.0
        %1136 = vmatpush1.msra.mxu0 0.0
        %1137 = vmatprep.subr.mxu0 0.0
        %1138 = vmatpush1.msra.mxu0 0.0
        %1139 = vmatprep.subr.mxu0 0.0
        %1140 = vmatpush1.msra.mxu0 0.0
        %1141 = vmatprep.subr.mxu0 0.0
        %1142 = vmatpush1.msra.mxu0 0.0
        %1143 = vmatprep.subr.mxu0 0.0
        %1144 = vmatpush1.msra.mxu0 0.0
        %1145 = vmatprep.subr.mxu0 0.0
        %1146 = vmatpush1.msra.mxu0 0.0
        %1147 = vmatprep.subr.mxu0 0.0
        %1148 = vmatpush1.msra.mxu0 0.0
        %1149 = vmatprep.subr.mxu0 0.0
        %1150 = vmatpush1.msra.mxu0 0.0
        %1151 = vmatprep.subr.mxu0 0.0
        %1152 = vmatpush1.msra.mxu0 0.0
        %1153 = vmatprep.subr.mxu0 0.0
        %1154 = vmatpush1.msra.mxu0 0.0
        %1155 = vmatprep.subr.mxu0 0.0
        %1156 = vmatpush1.msra.mxu0 0.0
        %1157 = vmatprep.subr.mxu0 0.0
        %1158 = vmatpush1.msra.mxu0 0.0
        %1159 = vmatprep.subr.mxu0 0.0
        %1160 = vmatpush1.msra.mxu0 0.0
        %1161 = vmatprep.subr.mxu0 0.0
        %v1162 = vand.u32 %v755, 4294901760
        %1163 = vmatpush1.msra.mxu0 %v1162
        %1164 = vmatprep.subr.mxu0 0.0
        %1165 = vmatpush2.msra.mxu0 0.0
        %1166 = vmatprep.subr.mxu0 0.0
        %1167 = vmatpush2.msra.mxu0 0.0
        %1168 = vmatprep.subr.mxu0 0.0
        %1169 = vmatpush2.msra.mxu0 0.0
        %1170 = vmatprep.subr.mxu0 0.0
        %1171 = vmatpush2.msra.mxu0 0.0
        %1172 = vmatprep.subr.mxu0 0.0
        %1173 = vmatpush2.msra.mxu0 0.0
        %1174 = vmatprep.subr.mxu0 0.0
        %1175 = vmatpush2.msra.mxu0 0.0
        %1176 = vmatprep.subr.mxu0 0.0
        %1177 = vmatpush2.msra.mxu0 0.0
        %1178 = vmatprep.subr.mxu0 0.0
        %1179 = vmatpush2.msra.mxu0 0.0
        %1180 = vmatprep.subr.mxu0 0.0
        %1181 = vmatpush2.msra.mxu0 0.0
        %1182 = vmatprep.subr.mxu0 0.0
        %1183 = vmatpush2.msra.mxu0 0.0
        %1184 = vmatprep.subr.mxu0 0.0
        %1185 = vmatpush2.msra.mxu0 0.0
        %1186 = vmatprep.subr.mxu0 0.0
        %1187 = vmatpush2.msra.mxu0 0.0
        %1188 = vmatprep.subr.mxu0 0.0
        %1189 = vmatpush2.msra.mxu0 0.0
        %1190 = vmatprep.subr.mxu0 0.0
        %1191 = vmatpush2.msra.mxu0 0.0
        %1192 = vmatprep.subr.mxu0 0.0
        %1193 = vmatpush2.msra.mxu0 0.0
        %1194 = vmatprep.subr.mxu0 0.0
        %1195 = vmatpush2.msra.mxu0 0.0
        %1196 = vmatprep.mubr.f32.mxu0 0.0
        %v1197 = vand.u32 %v752, 4294901760
        %1198 = vmatmul.mubr.f32.gmra.mxu0 %v1197
        %v1199 = vpop.f32.mrf.mxu0
        %v1200 = vadd.f32 %v1128, %v1199
        %v1201 = vpop.f32.mrf.mxu0
        %1202 = vdwg.mxu0
        %v1203 = vadd.f32 %v1200, %v289
        %1204 = vst [vmem:[%s220] sm:$0xff] %v1203
        %s1205 = sand.u32 %s139, 1
        %s1206 = scalar_lea.sflag [#allocation7], %s1205
        %s1207 = sand.u32 %s139, 1
        %s1208 = smul.addr %s1207, 8
        %s1209 = scalar_lea.vmem [#allocation6], %s1208
        // Predicated region
        $region67: #{tpu_custom_call.1} parent=35 // pred_check
          %p1210 = pneg %p149
        $region68: #{tpu_custom_call.1} parent=35 // pred_check_branch
          %1212 = sbr.rel (%p1210) target = $region70
        $region69: #{tpu_custom_call.1} parent=35 // pred_region
          %s1214 = ssub.s32 128, 128
          %1215 = vsyncadd %s1206, %s1214
          %s1216 = smul.addr %s30, 2
          %s1217 = sadd.s32 %s31, %s1216
          %s1218 = smul.addr %s1217, 128
          %s1219 = scalar_lea.hbm %s6, %s1218
          %s1221 = sshll.u32 %s1209, 4
          %s1222 = int_to_ptr.vmem [resolvable:$true] %s1221
          %1224 = dma.vmem_to_hbm [thread:$0]  %s1222, 128, %s1219, %s1206
        $region70: #{tpu_custom_call.1} parent=35 // pred_fallthru
          _
      $region36: #{tpu_custom_call.1} parent=5 // pred_fallthru
        _
      %p1225 = scmp.le.s32.totalorder 2, %s21
      // Predicated region
      $region71: #{tpu_custom_call.1} parent=5 // pred_check
        %p1226 = pneg %p1225
      $region72: #{tpu_custom_call.1} parent=5 // pred_check_branch
        %1228 = sbr.rel (%p1226) target = $region74
      $region73: #{tpu_custom_call.1} parent=5 // pred_region
        %s1229 = ssub.s32 %s21, 2
        // Predicated region
        $region75: #{tpu_custom_call.1} parent=73 // pred_check
          %p1230 = pneg %p155
        $region76: #{tpu_custom_call.1} parent=73 // pred_check_branch
          %1232 = sbr.rel (%p1230) target = $region78
        $region77: #{tpu_custom_call.1} parent=73 // pred_region
          %s1233 = sand.u32 %s140, 1
          %s1234 = scalar_lea.sflag [#allocation7], %s1233
          %s1235 = sand.u32 %s140, 1
          %s1236 = smul.addr %s1235, 8
          %s1237 = scalar_lea.vmem [#allocation6], %s1236
          %1238 = dma.done %s1234, 128
        $region78: #{tpu_custom_call.1} parent=73 // pred_fallthru
          _
      $region74: #{tpu_custom_call.1} parent=5 // pred_fallthru
        _
    $region6: #{tpu_custom_call.1} parent=1 // loop_footer
      %s25 = sadd.s32 1, %s21
    $region7: #{tpu_custom_call.1} parent=1 // loop_footer_branch
      %20 = sbr.rel target = $region3
    $region8: #{tpu_custom_call.1} parent=1 // loop_exit
      _
    %1239 = vsyncpa [#allocation7], 1
    %s1240 = scalar_lea.sflag [#allocation7], 1
    %1241 = vsyncpa %s1240, 1
  %1242 = vsyncmov [#allocation3]
  %s1243 = vpop.sfrf %1242
  %p1244 = scmp.eq.s32.totalorder %s1243, 0
  %p1245 = pneg %p1244
  %1247 = shalt.err (%p1245)

</llo_original>
